<compile_context>
chip_gen: v7x
topology: tpu7x:2x2x1
jax: 0.10.0
libtpu: 0.0.40
codegen_flags: <defaults>
</compile_context>

<pallas_src>
import math

import jax
import jax.numpy as jnp
from jax.experimental import pallas as pl
from jax.experimental.pallas import tpu as pltpu


def poly_encoder_kernel(coeffs_ref, w_up_t_ref, w_mix_ref, out_ref):
    """One batch tile: fused p-mix (VPU/XLU) + single lane-dense MXU matmul.

    coeffs_ref : (TB, P, IN)        VMEM
    w_up_t_ref : (IN, POLY_PAD)     VMEM  (pre-transposed, lane-padded in wrapper)
    w_mix_ref  : (1, P)             VMEM
    out_ref    : (TB, POLY_PAD)     VMEM
    """
    coeffs = coeffs_ref[...]                         # (TB, P, IN)
    w_mix = w_mix_ref[...]                           # (1, P)

    # Fused mix over p: mixed[b, k] = sum_i w_mix[0, i] * coeffs[b, i, k]
    mixed = jnp.einsum(
        "bpk,p->bk", coeffs, w_mix[0, :], preferred_element_type=jnp.float32
    )                                                # (TB, IN)

    # Single 2-D MXU matmul against pre-transposed weight -> lane-dense output.
    out = jnp.dot(
        mixed, w_up_t_ref[...], preferred_element_type=jnp.float32
    )                                                # (TB, POLY_PAD)

    out_ref[...] = out.astype(out_ref.dtype)


def poly_encoder(coeffs, w_up, w_mix):
    """coeffs: (B, P, IN); w_up: (POLY, IN) (nn.Linear layout); w_mix: (1, P).

    Returns (B, POLY) for B > 1, and (POLY,) for B == 1 (matching torch .squeeze()).
    """
    B, P, IN = coeffs.shape
    POLY = w_up.shape[0]
    out_dtype = coeffs.dtype

    # Wrapper-side weight prep: transpose to (IN, POLY) and pad POLY up to a
    # multiple of 128 so stores are unmasked and MXU N-dim is lane-dense.
    w_up_t = jnp.swapaxes(w_up, 0, 1)                         # (IN, POLY)
    poly_pad = pl.cdiv(POLY, 128) * 128
    if poly_pad != POLY:
        w_up_t = jnp.pad(w_up_t, ((0, 0), (0, poly_pad - POLY)))

    # Batch tile: as large as comfortably fits a conservative VMEM budget
    # (double-buffered coeffs + out, f32), multiple of 8 for the output block.
    bytes_per_row = 4 * (2 * P * IN + 2 * poly_pad)
    tb = max(8, (16 * 1024 * 1024) // max(bytes_per_row, 1))
    tb = min((tb // 8) * 8, 2048)
    if tb >= B:
        tb = B
        b_pad = B
    else:
        b_pad = pl.cdiv(B, tb) * tb

    coeffs_p = (
        coeffs if b_pad == B
        else jnp.pad(coeffs, ((0, b_pad - B), (0, 0), (0, 0)))
    )

    grid = (b_pad // tb,)

    out = pl.pallas_call(
        poly_encoder_kernel,
        out_shape=jax.ShapeDtypeStruct((b_pad, poly_pad), out_dtype),
        grid=grid,
        in_specs=[
            pl.BlockSpec((tb, P, IN), lambda i: (i, 0, 0)),
            pl.BlockSpec((IN, poly_pad), lambda i: (0, 0)),
            pl.BlockSpec((1, P), lambda i: (0, 0)),
        ],
        out_specs=pl.BlockSpec((tb, poly_pad), lambda i: (i, 0)),
        compiler_params=pltpu.CompilerParams(
            dimension_semantics=("parallel",)
        ),
    )(coeffs_p, w_up_t, w_mix)

    out = out[:B, :POLY]
    if B == 1:
        # torch .squeeze() also drops a size-1 batch dim.
        out = out[0]
    return out


def reference(coeffs, w_up, w_mix):
    x = jnp.einsum("bik,dk->bid", coeffs, w_up)
    out = jnp.einsum("bid,i->bd", x, w_mix[0])
    return out


if __name__ == "__main__":
    # Small shapes consistent with the module: batch=2, p=8, in_dim=32, poly_dim=64
    B, P, IN_DIM, POLY_DIM = 2, 8, 32, 64

    key = jax.random.PRNGKey(0)
    k_coeffs, k_up, k_mix = jax.random.split(key, 3)

    coeffs = jax.random.normal(k_coeffs, (B, P, IN_DIM), dtype=jnp.float32)

    # Deterministic parameter init mimicking nn.Linear defaults
    # (uniform in +-1/sqrt(fan_in)); weights stored as (out_features, in_features).
    bound_up = 1.0 / math.sqrt(IN_DIM)
    w_up = jax.random.uniform(
        k_up, (POLY_DIM, IN_DIM), dtype=jnp.float32,
        minval=-bound_up, maxval=bound_up,
    )
    bound_mix = 1.0 / math.sqrt(P)
    w_mix = jax.random.uniform(
        k_mix, (1, P), dtype=jnp.float32,
        minval=-bound_mix, maxval=bound_mix,
    )

    out = poly_encoder(coeffs, w_up, w_mix)
    out = jax.block_until_ready(out)

    ref = reference(coeffs, w_up, w_mix)
    assert out.shape == (B, POLY_DIM), out.shape
    assert jnp.allclose(out, ref, atol=1e-4, rtol=1e-4), (
        float(jnp.max(jnp.abs(out - ref)))
    )

    print("KERNEL_OK")
</pallas_src>

<mosaic_0001>
module attributes {stable_mosaic.version = 11 : i64} {
  func.func @poly_encoder_kernel(%arg0: i32, %arg1: memref<2x8x32xf32, #tpu.memory_space<vmem>>, %arg2: memref<32x128xf32, #tpu.memory_space<vmem>>, %arg3: memref<1x8xf32, #tpu.memory_space<vmem>>, %arg4: memref<2x128xf32, #tpu.memory_space<vmem>>) attributes {dimension_semantics = [#tpu.dimension_semantics<parallel>], iteration_bounds = array<i64: 1>, scalar_prefetch = 0 : i64, scratch_operands = 0 : i64, tpu.core_type = #tpu.core_type<tc>, window_params = [{transform_indices = @transform_0, window_bounds = array<i64: 2, 8, 32>}, {pipeline_mode = #tpu.pipeline_mode<synchronous>, transform_indices = @transform_1, window_bounds = array<i64: 32, 128>}, {pipeline_mode = #tpu.pipeline_mode<synchronous>, transform_indices = @transform_2, window_bounds = array<i64: 1, 8>}, {transform_indices = @transform_3, window_bounds = array<i64: 2, 128>}]} {
    %c0 = arith.constant 0 : index
    %c0_0 = arith.constant 0 : index
    %c0_1 = arith.constant 0 : index
    %0 = vector.load %arg1[%c0, %c0_0, %c0_1] : memref<2x8x32xf32, #tpu.memory_space<vmem>>, vector<2x8x32xf32>
    %c0_2 = arith.constant 0 : index
    %c0_3 = arith.constant 0 : index
    %1 = vector.load %arg3[%c0_2, %c0_3] : memref<1x8xf32, #tpu.memory_space<vmem>>, vector<1x8xf32>
    %2 = vector.shape_cast %1 : vector<1x8xf32> to vector<8xf32>
    "tpu.trace_start"() <{level = 10 : i32, message = "bpk,p->bk"}> : () -> ()
    %cst = arith.constant dense<0.000000e+00> : vector<2x32xf32>
    %3 = tpu.matmul %0, %2, %cst {dimension_numbers = #tpu.dot_dimension_numbers<[1], [0], [0, 2], [], [0, 0, 0, 2], [], []>} : vector<2x8x32xf32>, vector<8xf32>, vector<2x32xf32> -> vector<2x32xf32>
    "tpu.trace_stop"() : () -> ()
    %c0_4 = arith.constant 0 : index
    %c0_5 = arith.constant 0 : index
    %4 = vector.load %arg2[%c0_4, %c0_5] : memref<32x128xf32, #tpu.memory_space<vmem>>, vector<32x128xf32>
    %cst_6 = arith.constant dense<0.000000e+00> : vector<2x128xf32>
    %5 = tpu.matmul %3, %4, %cst_6 {dimension_numbers = #tpu.dot_dimension_numbers<[1], [0], [0], [1], [0, 0, 1, 1], [], []>} : vector<2x32xf32>, vector<32x128xf32>, vector<2x128xf32> -> vector<2x128xf32>
    %c0_7 = arith.constant 0 : index
    %c0_8 = arith.constant 0 : index
    %6 = vector.load %arg4[%c0_7, %c0_8] : memref<2x128xf32, #tpu.memory_space<vmem>>, vector<2x128xf32>
    tpu.vector_store %arg4[%c0_7, %c0_8], %5 {strides = array<i32>} : memref<2x128xf32, #tpu.memory_space<vmem>>, vector<2x128xf32>,
    return
  }
  func.func @transform_0(%arg0: i32) -> (i32, i32, i32) {
    %c0_i32 = arith.constant 0 : i32
    %c0_i32_0 = arith.constant 0 : i32
    %c0_i32_1 = arith.constant 0 : i32
    return %arg0, %c0_i32, %c0_i32_0 : i32, i32, i32
  }
  func.func @transform_1(%arg0: i32) -> (i32, i32) {
    %c0_i32 = arith.constant 0 : i32
    %c0_i32_0 = arith.constant 0 : i32
    %c0_i32_1 = arith.constant 0 : i32
    return %c0_i32, %c0_i32_0 : i32, i32
  }
  func.func @transform_2(%arg0: i32) -> (i32, i32) {
    %c0_i32 = arith.constant 0 : i32
    %c0_i32_0 = arith.constant 0 : i32
    %c0_i32_1 = arith.constant 0 : i32
    return %c0_i32, %c0_i32_0 : i32, i32
  }
  func.func @transform_3(%arg0: i32) -> (i32, i32) {
    %c0_i32 = arith.constant 0 : i32
    %c0_i32_0 = arith.constant 0 : i32
    return %arg0, %c0_i32 : i32, i32
  }
}

</mosaic_0001>

<llo_original>
// kernel: tpu_custom_call.1
$region0: #{tpu_custom_call.1}
  #allocation0 [shape = 'u32[]', space=smem, size = 0x4, offset = 0x4, fixed_abs, tag = 'smem constant byte address 0x4 - core index']
  #allocation1 [shape = 'u32[144,128]{1,0:T(1,128)}', space=vmem, size = 0x12000, scoped, tag = 'internal scratch']
  %s0 = inlined_call_operand.hbm [shape: f32[2,8,32], index: 0, kind: input, shape index: {}]
  %s1 = inlined_call_operand.hbm [shape: f32[32,128], index: 1, kind: input, shape index: {}]
  %s2 = inlined_call_operand.vmem [shape: f32[1,8], index: 2, kind: input, shape index: {}]
  %s3 = inlined_call_operand.hbm [shape: f32[2,128], index: 3, kind: output, shape index: {}]
  %s4 = sld [smem:[#allocation0]]
  $region30: #{tpu_custom_call.1} parent=0
    _
  %s6 = ssub.s32 1, %s4
  %s7 = scalar_select 0, %s6, %s4
  $region1: #{tpu_custom_call.1} parent=0
    #allocation2 [shape = 'u8[8192]{0}', space=vmem, size = 0x2000, scoped, tag = 'input window, operand 0, single buffered']
    #allocation3 [shape = 's32[1]{0}', space=sflag, size = 0x4, scoped, tag = 'scoped memory for tpu_custom_call.1']
    #allocation4 [shape = 's32[1]{0}', space=sflag, size = 0x4, scoped, tag = 'scoped memory for tpu_custom_call.1']
    #allocation5 [shape = 'u8[16384]{0}', space=vmem, size = 0x4000, scoped, tag = 'input window, operand 1, single buffered']
    #allocation6 [shape = 's32[1]{0}', space=sflag, size = 0x4, scoped, tag = 'scoped memory for tpu_custom_call.1']
    #allocation7 [shape = 'u8[1024]{0}', space=vmem, size = 0x400, scoped, tag = 'output window, operand 0, single buffered']
    %8 = vsyncpa [#allocation3], 0
    %9 = vsyncpa [#allocation6], 0
    %10 = vsyncpa [#allocation4], 0
    // Predicated region
    $region2: #{tpu_custom_call.1} parent=1 // pred_check
      _
    $region3: #{tpu_custom_call.1} parent=1 // pred_check_branch
      %12 = sbr.rel (0) target = $region5
    $region4: #{tpu_custom_call.1} parent=1 // pred_region
      %s14 = ssub.s32 256, 256
      %15 = vsyncadd [#allocation3], %s14
      %s16 = sshll.u32 [#allocation2], 4
      %s17 = int_to_ptr.vmem [resolvable:$true] %s16
      %22 = dma.hbm_to_vmem [thread:$0]  %s0, 256, %s17, [#allocation3], 128, 128, 8
    $region5: #{tpu_custom_call.1} parent=1 // pred_fallthru
      _
    // Predicated region
    $region6: #{tpu_custom_call.1} parent=1 // pred_check
      _
    $region7: #{tpu_custom_call.1} parent=1 // pred_check_branch
      %24 = sbr.rel (0) target = $region9
    $region8: #{tpu_custom_call.1} parent=1 // pred_region
      %s26 = ssub.s32 512, 512
      %27 = vsyncadd [#allocation6], %s26
      %s28 = sshll.u32 [#allocation5], 4
      %s29 = int_to_ptr.vmem [resolvable:$true] %s28
      %34 = dma.hbm_to_vmem [thread:$0]  %s1, 512, %s29, [#allocation6], 128, 128, 8
    $region9: #{tpu_custom_call.1} parent=1 // pred_fallthru
      _
    // Predicated region
    $region10: #{tpu_custom_call.1} parent=1 // pred_check
      _
    $region11: #{tpu_custom_call.1} parent=1 // pred_check_branch
      %36 = sbr.rel (0) target = $region13
    $region12: #{tpu_custom_call.1} parent=1 // pred_region
      _
    $region13: #{tpu_custom_call.1} parent=1 // pred_fallthru
      _
    // Predicated region
    $region14: #{tpu_custom_call.1} parent=1 // pred_check
      _
    $region15: #{tpu_custom_call.1} parent=1 // pred_check_branch
      %38 = sbr.rel (0) target = $region17
    $region16: #{tpu_custom_call.1} parent=1 // pred_region
      %39 = dma.done [#allocation3], 256
    $region17: #{tpu_custom_call.1} parent=1 // pred_fallthru
      _
    // Predicated region
    $region18: #{tpu_custom_call.1} parent=1 // pred_check
      _
    $region19: #{tpu_custom_call.1} parent=1 // pred_check_branch
      %41 = sbr.rel (0) target = $region21
    $region20: #{tpu_custom_call.1} parent=1 // pred_region
      %42 = dma.done [#allocation6], 512
    $region21: #{tpu_custom_call.1} parent=1 // pred_fallthru
      _
    %v43 = vld [vmem:[#allocation2] sm:$0xff]
    %v44 = vld [vmem:[#allocation2 + $0x8] sm:$0xff]
    %v45 = vld [vmem:[%s2] sm:$0x1]
    %46 = vxpose.xlu0.b32.start [1/16] %v43, 128
    %47 = vxpose.xlu0.b32.cont [2/16] 0.0, 128
    %48 = vxpose.xlu0.b32.cont [3/16] 0.0, 128
    %49 = vxpose.xlu0.b32.cont [4/16] 0.0, 128
    %50 = vxpose.xlu0.b32.cont [5/16] 0.0, 128
    %51 = vxpose.xlu0.b32.cont [6/16] 0.0, 128
    %52 = vxpose.xlu0.b32.cont [7/16] 0.0, 128
    %53 = vxpose.xlu0.b32.cont [8/16] 0.0, 128
    %54 = vxpose.xlu0.b32.cont [9/16] 0.0, 128
    %55 = vxpose.xlu0.b32.cont [10/16] 0.0, 128
    %56 = vxpose.xlu0.b32.cont [11/16] 0.0, 128
    %57 = vxpose.xlu0.b32.cont [12/16] 0.0, 128
    %58 = vxpose.xlu0.b32.cont [13/16] 0.0, 128
    %59 = vxpose.xlu0.b32.cont [14/16] 0.0, 128
    %60 = vxpose.xlu0.b32.cont [15/16] 0.0, 128
    %61 = vxpose.xlu0.b32.end [16/16] 0.0, 128
    %v62 = vpop.trf.xlu0
    %v63 = vpop.trf.xlu0
    %v64 = vpop.trf.xlu0
    %v65 = vpop.trf.xlu0
    %v66 = vpop.trf.xlu0
    %v67 = vpop.trf.xlu0
    %v68 = vpop.trf.xlu0
    %v69 = vpop.trf.xlu0
    %v70 = vpop.trf.xlu0
    %v71 = vpop.trf.xlu0
    %v72 = vpop.trf.xlu0
    %v73 = vpop.trf.xlu0
    %v74 = vpop.trf.xlu0
    %v75 = vpop.trf.xlu0
    %v76 = vpop.trf.xlu0
    %v77 = vpop.trf.xlu0
    %78 = vxpose.xlu0.b32.start [1/16] %v44, 128
    %79 = vxpose.xlu0.b32.cont [2/16] 0.0, 128
    %80 = vxpose.xlu0.b32.cont [3/16] 0.0, 128
    %81 = vxpose.xlu0.b32.cont [4/16] 0.0, 128
    %82 = vxpose.xlu0.b32.cont [5/16] 0.0, 128
    %83 = vxpose.xlu0.b32.cont [6/16] 0.0, 128
    %84 = vxpose.xlu0.b32.cont [7/16] 0.0, 128
    %85 = vxpose.xlu0.b32.cont [8/16] 0.0, 128
    %86 = vxpose.xlu0.b32.cont [9/16] 0.0, 128
    %87 = vxpose.xlu0.b32.cont [10/16] 0.0, 128
    %88 = vxpose.xlu0.b32.cont [11/16] 0.0, 128
    %89 = vxpose.xlu0.b32.cont [12/16] 0.0, 128
    %90 = vxpose.xlu0.b32.cont [13/16] 0.0, 128
    %91 = vxpose.xlu0.b32.cont [14/16] 0.0, 128
    %92 = vxpose.xlu0.b32.cont [15/16] 0.0, 128
    %93 = vxpose.xlu0.b32.end [16/16] 0.0, 128
    %v94 = vpop.trf.xlu0
    %v95 = vpop.trf.xlu0
    %v96 = vpop.trf.xlu0
    %v97 = vpop.trf.xlu0
    %v98 = vpop.trf.xlu0
    %v99 = vpop.trf.xlu0
    %v100 = vpop.trf.xlu0
    %v101 = vpop.trf.xlu0
    %v102 = vpop.trf.xlu0
    %v103 = vpop.trf.xlu0
    %v104 = vpop.trf.xlu0
    %v105 = vpop.trf.xlu0
    %v106 = vpop.trf.xlu0
    %v107 = vpop.trf.xlu0
    %v108 = vpop.trf.xlu0
    %v109 = vpop.trf.xlu0
    %v111 = vlaneseq
    %v112 = vshrl.u32 %v111, 7
    %v113 = vsub.s32 0, %v112
    %v114 = vrot.slane %v45, %v113
    %v116 = vmul.f32 %v62, %v114
    %v117 = vmul.f32 %v63, %v114
    %v118 = vmul.f32 %v64, %v114
    %v119 = vmul.f32 %v65, %v114
    %v120 = vmul.f32 %v94, %v114
    %v121 = vmul.f32 %v95, %v114
    %v122 = vmul.f32 %v96, %v114
    %v123 = vmul.f32 %v97, %v114
    %vm124 = vcmask 64512
    %v125 = vsel %vm124, %v116, 0.0
    %126 = vadd.xlane.f32.xlu0 %v125
    %v127 = vpop.xlane.xlu0 %126
    %v128 = vsel %vm124, %v117, 0.0
    %129 = vadd.xlane.f32.xlu0 %v128
    %v130 = vpop.xlane.xlu0 %129
    %v131 = vsel %vm124, %v118, 0.0
    %132 = vadd.xlane.f32.xlu0 %v131
    %v133 = vpop.xlane.xlu0 %132
    %v134 = vsel %vm124, %v119, 0.0
    %135 = vadd.xlane.f32.xlu0 %v134
    %v136 = vpop.xlane.xlu0 %135
    %v137 = vsel %vm124, %v120, 0.0
    %138 = vadd.xlane.f32.xlu0 %v137
    %v139 = vpop.xlane.xlu0 %138
    %v140 = vsel %vm124, %v121, 0.0
    %141 = vadd.xlane.f32.xlu0 %v140
    %v142 = vpop.xlane.xlu0 %141
    %v143 = vsel %vm124, %v122, 0.0
    %144 = vadd.xlane.f32.xlu0 %v143
    %v145 = vpop.xlane.xlu0 %144
    %v146 = vsel %vm124, %v123, 0.0
    %147 = vadd.xlane.f32.xlu0 %v146
    %v148 = vpop.xlane.xlu0 %147
    %v149 = vld [vmem:[#allocation5] sm:$0xff]
    %v150 = vld [vmem:[#allocation5 + $0x8] sm:$0xff]
    %v151 = vld [vmem:[#allocation5 + $0x10] sm:$0xff]
    %v152 = vld [vmem:[#allocation5 + $0x18] sm:$0xff]
    %v161 = vlaneseq
    %v162 = vand.u32 %v161, 127
    %v163 = vlaneseq
    %v164 = vshrl.u32 %v163, 7
    %v165 = vsub.s32 %v162, %v164
    %v166 = vrot.slane %v127, %v165
    %v167 = vadd.s32 %v162, 4294967288
    %v168 = vlaneseq
    %v169 = vshrl.u32 %v168, 7
    %v170 = vsub.s32 %v167, %v169
    %v171 = vrot.slane %v130, %v170
    %vm172 = vcmask 130112
    %v173 = vsel %vm172, %v171, %v166
    %v174 = vadd.s32 %v162, 4294967280
    %v175 = vlaneseq
    %v176 = vshrl.u32 %v175, 7
    %v177 = vsub.s32 %v174, %v176
    %v178 = vrot.slane %v133, %v177
    %vm179 = vcmask 195712
    %v180 = vsel %vm179, %v178, %v173
    %v181 = vadd.s32 %v162, 4294967272
    %v182 = vlaneseq
    %v183 = vshrl.u32 %v182, 7
    %v184 = vsub.s32 %v181, %v183
    %v185 = vrot.slane %v136, %v184
    %vm186 = vcmask 261312
    %v187 = vsel %vm186, %v185, %v180
    %v188 = vlaneseq
    %v189 = vshrl.u32 %v188, 7
    %v190 = vsub.s32 %v162, %v189
    %v191 = vrot.slane %v139, %v190
    %v192 = vlaneseq
    %v193 = vshrl.u32 %v192, 7
    %v194 = vsub.s32 %v167, %v193
    %v195 = vrot.slane %v142, %v194
    %v196 = vsel %vm172, %v195, %v191
    %v197 = vlaneseq
    %v198 = vshrl.u32 %v197, 7
    %v199 = vsub.s32 %v174, %v198
    %v200 = vrot.slane %v145, %v199
    %v201 = vsel %vm179, %v200, %v196
    %v202 = vlaneseq
    %v203 = vshrl.u32 %v202, 7
    %v204 = vsub.s32 %v181, %v203
    %v205 = vrot.slane %v148, %v204
    %v206 = vsel %vm186, %v205, %v201
    %vm207 = vcmask 1041409
    %v208 = vsel %vm207, %v206, %v187
    %vm209 = vcmask 261120
    %v210 = vsel %vm209, %v208, 0
    %212 = vmatprep.subr.mxu0 0.0
    %213 = vmatpush1.msra.mxu0 %v149
    %214 = vmatprep.subr.mxu0 0.0
    %215 = vmatpush1.msra.mxu0 %v150
    %216 = vmatprep.subr.mxu0 0.0
    %217 = vmatpush1.msra.mxu0 %v151
    %218 = vmatprep.subr.mxu0 0.0
    %219 = vmatpush1.msra.mxu0 %v152
    %220 = vmatprep.subr.mxu0 0.0
    %221 = vmatpush1.msra.mxu0 0.0
    %222 = vmatprep.subr.mxu0 0.0
    %223 = vmatpush1.msra.mxu0 0.0
    %224 = vmatprep.subr.mxu0 0.0
    %225 = vmatpush1.msra.mxu0 0.0
    %226 = vmatprep.subr.mxu0 0.0
    %227 = vmatpush1.msra.mxu0 0.0
    %228 = vmatprep.subr.mxu0 0.0
    %229 = vmatpush1.msra.mxu0 0.0
    %230 = vmatprep.subr.mxu0 0.0
    %231 = vmatpush1.msra.mxu0 0.0
    %232 = vmatprep.subr.mxu0 0.0
    %233 = vmatpush1.msra.mxu0 0.0
    %234 = vmatprep.subr.mxu0 0.0
    %235 = vmatpush1.msra.mxu0 0.0
    %236 = vmatprep.subr.mxu0 0.0
    %237 = vmatpush1.msra.mxu0 0.0
    %238 = vmatprep.subr.mxu0 0.0
    %239 = vmatpush1.msra.mxu0 0.0
    %240 = vmatprep.subr.mxu0 0.0
    %241 = vmatpush1.msra.mxu0 0.0
    %242 = vmatprep.subr.mxu0 0.0
    %243 = vmatpush1.msra.mxu0 0.0
    %244 = vmatprep.subr.mxu0 0.0
    %245 = vmatpush1.msra.mxu0 0.0
    %246 = vmatprep.subr.mxu0 0.0
    %247 = vmatpush1.msra.mxu0 0.0
    %248 = vmatprep.subr.mxu0 0.0
    %249 = vmatpush1.msra.mxu0 0.0
    %250 = vmatprep.subr.mxu0 0.0
    %251 = vmatpush1.msra.mxu0 0.0
    %252 = vmatprep.subr.mxu0 0.0
    %253 = vmatpush1.msra.mxu0 0.0
    %254 = vmatprep.subr.mxu0 0.0
    %255 = vmatpush1.msra.mxu0 0.0
    %256 = vmatprep.subr.mxu0 0.0
    %257 = vmatpush1.msra.mxu0 0.0
    %258 = vmatprep.subr.mxu0 0.0
    %259 = vmatpush1.msra.mxu0 0.0
    %260 = vmatprep.subr.mxu0 0.0
    %261 = vmatpush1.msra.mxu0 0.0
    %262 = vmatprep.subr.mxu0 0.0
    %263 = vmatpush1.msra.mxu0 0.0
    %264 = vmatprep.subr.mxu0 0.0
    %265 = vmatpush1.msra.mxu0 0.0
    %266 = vmatprep.subr.mxu0 0.0
    %267 = vmatpush1.msra.mxu0 0.0
    %268 = vmatprep.subr.mxu0 0.0
    %269 = vmatpush1.msra.mxu0 0.0
    %270 = vmatprep.subr.mxu0 0.0
    %271 = vmatpush1.msra.mxu0 0.0
    %272 = vmatprep.subr.mxu0 0.0
    %273 = vmatpush1.msra.mxu0 0.0
    %274 = vmatprep.subr.mxu0 0.0
    %275 = vmatpush1.msra.mxu0 0.0
    %276 = vmatprep.mubr.f32.mxu0 0.0
    %277 = vmatmul.mubr.f32.gmra.mrb[0].mxu0 %v210
    %v278 = vpop.f32.mrb[0].mxu0
    %v279 = vadd.f32 0.0, %v278
    %v280 = vpop.f32.mrb[0].mxu0
    %281 = vdwg.mxu0
    %282 = vst [vmem:[#allocation7] sm:$0x3] %v279
    // Predicated region
    $region22: #{tpu_custom_call.1} parent=1 // pred_check
      _
    $region23: #{tpu_custom_call.1} parent=1 // pred_check_branch
      %284 = sbr.rel (0) target = $region25
    $region24: #{tpu_custom_call.1} parent=1 // pred_region
      %s286 = ssub.s32 32, 32
      %287 = vsyncadd [#allocation4], %s286
      %s289 = sshll.u32 [#allocation7], 4
      %s290 = int_to_ptr.vmem [resolvable:$true] %s289
      %292 = dma.vmem_to_hbm [thread:$0]  %s290, 32, %s3, [#allocation4]
    $region25: #{tpu_custom_call.1} parent=1 // pred_fallthru
      _
    // Predicated region
    $region26: #{tpu_custom_call.1} parent=1 // pred_check
      _
    $region27: #{tpu_custom_call.1} parent=1 // pred_check_branch
      %294 = sbr.rel (0) target = $region29
    $region28: #{tpu_custom_call.1} parent=1 // pred_region
      %295 = dma.done [#allocation4], 32
    $region29: #{tpu_custom_call.1} parent=1 // pred_fallthru
      _
    %296 = vsyncpa [#allocation3], 1
    %297 = vsyncpa [#allocation6], 1
    %298 = vsyncpa [#allocation4], 1

</llo_original>
